<compile_context>
chip_gen: v7x
topology: tpu7x:2x2x1
jax: 0.10.0
libtpu: 0.0.40
codegen_flags: <defaults>
</compile_context>

<pallas_src>
from functools import partial

import jax
import jax.numpy as jnp
import numpy as np
from jax.experimental import pallas as pl
from jax.experimental.pallas import tpu as pltpu


# ----------------------------------------------------------------------------
# Kernel 1: surrogate CrossEncoder scoring head, B-tiled (the only HBM-heavy part)
# ----------------------------------------------------------------------------
def _score_kernel(a_ref, p_ref, w_ref, s_ref):
    """Per batch-tile scoring.

    a_ref : (B_TILE, D) anchor embeddings          (VMEM block)
    p_ref : (B_TILE, D) positive embeddings        (VMEM block)
    w_ref : (2, D) split head: row0 scores the anchor half, row1 the candidate half
    s_ref : (B_TILE, 2) output block; col0 = s_a, col1 = s_c

    Algebraic split: score(concat(a, c) @ W + b) = a @ W[:D] + c @ W[D:] + b, so the
    C-fold duplicated (C*B, 2D) feature tensor of the reference never exists.
    Rank-1 contraction on the VPU (exact f32; an M=1 matmul would starve the MXU and the
    kernel is memory-bound anyway, so MXU push count is irrelevant here).
    """
    s_ref[:, 0:1] = jnp.sum(a_ref[...] * w_ref[0:1, :], axis=1, keepdims=True)
    s_ref[:, 1:2] = jnp.sum(p_ref[...] * w_ref[1:2, :], axis=1, keepdims=True)


# ----------------------------------------------------------------------------
# Kernel 2: MultipleNegativesRankingLoss.calculate_loss (tiny: O(B*(K+2)) bytes in)
# ----------------------------------------------------------------------------
def _mnrl_loss_kernel(num_negatives, scale, inv_batch,
                      s_col_ref, s_c_row_ref, neg_ref, bias_ref, loss_ref):
    """
    s_col_ref   : (B, 2)  col0 = anchor-half scores s_a, col1 = candidate-half scores s_c
    s_c_row_ref : (1, B)  same candidate-half scores, lane-oriented gather source
    neg_ref     : (B, K)  int32 in-batch negative indices (index plumbing only -- the old
                          (C, B, B) float32 one-hot input is gone)
    bias_ref    : (1, 1)  scoring-head bias (SMEM)
    loss_ref    : (1, 1)  mean loss (VMEM output)
    """
    batch = s_col_ref.shape[0]
    s_a = s_col_ref[:, 0:1]                      # (B, 1)
    s_c = s_col_ref[:, 1:2]                      # (B, 1)
    s_c_row = s_c_row_ref[...]                   # (1, B)
    base = s_a + bias_ref[0, 0]                  # bias hoisted: added exactly once

    # lane_j[b, j] = j ; compared against the per-row negative index (exact gather,
    # select + lane-reduce -- no MXU, no bf16 rounding of the gathered scores).
    lane_j = jax.lax.broadcasted_iota(jnp.int32, (batch, batch), 1)

    z_pos = jax.nn.sigmoid(base + s_c) * scale   # (B, 1) positive column (label = 0)
    zs = [z_pos]
    m = z_pos
    for k in range(num_negatives):               # static unroll, C - 1 = num_negatives (small)
        idx = neg_ref[:, k:k + 1]                                       # (B, 1) int32
        onehot = lane_j == idx                                          # (B, B)
        gathered = jnp.sum(jnp.where(onehot, s_c_row, 0.0),
                           axis=1, keepdims=True)                       # (B, 1) = s_c[idx[b]]
        z_k = jax.nn.sigmoid(base + gathered) * scale
        zs.append(z_k)
        m = jnp.maximum(m, z_k)

    # CrossEntropy(labels = 0) on the (B, C) logits, computed column-wise without ever
    # materialising a (C, B) scratch: logits stay register values.
    se = jnp.zeros_like(m)
    for z in zs:
        se = se + jnp.exp(z - m)
    lse = m + jnp.log(se)                        # (B, 1)
    per_example = lse - z_pos                    # -log softmax[label = 0]
    loss_ref[...] = jnp.sum(per_example, axis=0, keepdims=True) * inv_batch


# ----------------------------------------------------------------------------
# Tile sizing (v7x-aware) and the full forward, mirroring MultipleNegativesRankingLoss.forward
# ----------------------------------------------------------------------------
def _pick_b_tile(batch, dim):
    """Batch tile for the score kernel.

    Keep (2 inputs x 2 pipeline buffers) of (B_TILE, D) f32 under ~24 MiB so the kernel
    fits v7x's 64 MiB VMEM (and the 32 MiB default scoped limit) with headroom; v5e/v6e
    (128 MiB) gain nothing past ~512-row tiles.  Tiles are multiples of 128 so the
    (B_TILE, 2) output blocks and (B_TILE, D) input blocks satisfy the (8, 128) rules.
    """
    if batch <= 512:
        return batch                                  # single full-dim block (always legal)
    budget_rows = (24 << 20) // (16 * dim)            # 16 = 2 inputs * 2 buffers * 4 bytes
    for cand in (512, 256, 128):
        if cand <= max(budget_rows, 128) and batch % cand == 0:
            return cand
    return batch                                      # odd batch sizes: un-tiled (still correct)


def mnrl_forward(anchors_emb, positives_emb, w, bias, neg_indices, scale=10.0):
    B, D = anchors_emb.shape
    K = neg_indices.shape[1]

    # Split scoring head (pure reshape, no copy): row 0 = w[:D], row 1 = w[D:].
    w2 = w.reshape(2, D)

    # ---- Kernel 1: B-tiled, megacore-parallel scoring ------------------------------------
    b_tile = _pick_b_tile(B, D)
    grid = (B // b_tile,)
    # 2 pipeline buffers x (anchors + positives + w2 + out) per block, f32.
    need = 2 * 4 * (2 * b_tile * D + 2 * D + 2 * b_tile)
    scores = pl.pallas_call(
        _score_kernel,
        out_shape=jax.ShapeDtypeStruct((B, 2), jnp.float32),
        grid=grid,
        in_specs=[
            pl.BlockSpec((b_tile, D), lambda i: (i, 0)),   # anchors, natural (B, D) layout
            pl.BlockSpec((b_tile, D), lambda i: (i, 0)),   # positives, natural (B, D) layout
            pl.BlockSpec((2, D), lambda i: (0, 0)),        # split head weights (resident)
        ],
        out_specs=pl.BlockSpec((b_tile, 2), lambda i: (i, 0)),  # per-tile blocks: race-free
        compiler_params=pltpu.CompilerParams(
            dimension_semantics=("parallel",),             # v7x: 2 TCs split the batch tiles
            vmem_limit_bytes=int(min(max(need + (4 << 20), 16 << 20), 100 << 20)),
        ),
    )(anchors_emb, positives_emb, w2)

    # Only XLA-side layout op left: a 4*B-byte relayout of the candidate-score vector
    # (NOT the old full (B, D) embedding transpose).
    s_c_row = scores[:, 1].reshape(1, B)
    neg_i32 = neg_indices.astype(jnp.int32)

    # ---- Kernel 2: loss on O(B) data (no grid needed; reduction off the parallel axis) ----
    # NOTE: the per-negative (B, B) iota/select mask lives only in VMEM/registers; for
    # B ≳ 2-4K this kernel would also be tiled over the batch with per-tile partial sums.
    loss_kernel = partial(_mnrl_loss_kernel, K, float(scale), 1.0 / float(B))
    loss = pl.pallas_call(
        loss_kernel,
        out_shape=jax.ShapeDtypeStruct((1, 1), jnp.float32),
        in_specs=[
            pl.BlockSpec(memory_space=pltpu.MemorySpace.VMEM),   # (B, 2) scores
            pl.BlockSpec(memory_space=pltpu.MemorySpace.VMEM),   # (1, B) candidate scores (row)
            pl.BlockSpec(memory_space=pltpu.MemorySpace.VMEM),   # (B, K) int32 negative indices
            pl.BlockSpec(memory_space=pltpu.MemorySpace.SMEM),   # (1, 1) bias scalar
        ],
        out_specs=pl.BlockSpec(memory_space=pltpu.MemorySpace.VMEM),
        compiler_params=pltpu.CompilerParams(
            vmem_limit_bytes=int(min(max(8 * B * B + (4 << 20), 16 << 20), 100 << 20)),
        ),
    )(scores, s_c_row, neg_i32, bias.reshape(1, 1))
    return loss[0, 0]


if __name__ == "__main__":
    B, D = 8, 128           # batch size, synthetic text-embedding dim (head input = 2D = 256)
    num_negatives = 4
    scale = 10.0

    key = jax.random.PRNGKey(0)
    k_a, k_p, k_w, k_b = jax.random.split(key, 4)
    anchors_emb = jax.random.normal(k_a, (B, D), dtype=jnp.float32)
    positives_emb = jax.random.normal(k_p, (B, D), dtype=jnp.float32)

    # deterministic surrogate "CrossEncoder" head params (num_labels = 1)
    w = jax.random.normal(k_w, (2 * D, 1), dtype=jnp.float32) * 0.1
    bias = jax.random.normal(k_b, (1, 1), dtype=jnp.float32) * 0.1

    # in-batch negative sampling (get_in_batch_negatives): uniform, without replacement,
    # excluding the diagonal.  torch.multinomial randomness replaced by deterministic
    # jax.random sampling in the host wrapper (index plumbing only).
    skey = jax.random.PRNGKey(42)
    neg_rows = []
    for b_idx in range(B):
        allowed = jnp.array([j for j in range(B) if j != b_idx], dtype=jnp.int32)
        skey, sub = jax.random.split(skey)
        neg_rows.append(jax.random.permutation(sub, allowed)[:num_negatives])
    neg_indices = jnp.stack(neg_rows)  # (B, num_negatives)

    loss = mnrl_forward(anchors_emb, positives_emb, w, bias, neg_indices, scale=scale)
    loss = jax.block_until_ready(loss)

    # float64 numpy reference replicating the ORIGINAL module math
    # (feats -> reshape(C, B).T -> sigmoid -> *scale -> CE(labels=0)).
    C = 1 + num_negatives
    a_np = np.asarray(anchors_emb, dtype=np.float64)
    p_np = np.asarray(positives_emb, dtype=np.float64)
    w_np = np.asarray(w, dtype=np.float64)
    b_np = float(np.asarray(bias)[0, 0])
    neg_np = np.asarray(neg_indices)
    cand_cols = [p_np] + [p_np[neg_np[:, k]] for k in range(num_negatives)]
    feats = np.concatenate(
        [np.concatenate([a_np, c], axis=1) for c in cand_cols], axis=0
    )                                                     # (C*B, 2D), column-major pair order
    ref_logits = (feats @ w_np + b_np).reshape(C, B).T    # (B, C), column 0 = positive
    z = 1.0 / (1.0 + np.exp(-ref_logits)) * scale
    zmax = z.max(axis=1, keepdims=True)
    lse = zmax[:, 0] + np.log(np.exp(z - zmax).sum(axis=1))
    ref_loss = float(np.mean(lse - z[:, 0]))
    np.testing.assert_allclose(float(loss), ref_loss, rtol=1e-4, atol=1e-5)

    # TODO(synk): the real CrossEncoder transformer + tokenizer is not expressible as a
    # Pallas kernel; it is replaced by the deterministic linear scoring head above.
    print("KERNEL_OK")
</pallas_src>

<mosaic_0001>
module attributes {stable_mosaic.version = 11 : i64} {
  func.func @_score_kernel(%arg0: i32, %arg1: memref<8x128xf32, #tpu.memory_space<vmem>>, %arg2: memref<8x128xf32, #tpu.memory_space<vmem>>, %arg3: memref<2x128xf32, #tpu.memory_space<vmem>>, %arg4: memref<8x2xf32, #tpu.memory_space<vmem>>) attributes {dimension_semantics = [#tpu.dimension_semantics<parallel>], iteration_bounds = array<i64: 1>, scalar_prefetch = 0 : i64, scratch_operands = 0 : i64, tpu.core_type = #tpu.core_type<tc>, window_params = [{transform_indices = @transform_0, window_bounds = array<i64: 8, 128>}, {transform_indices = @transform_1, window_bounds = array<i64: 8, 128>}, {pipeline_mode = #tpu.pipeline_mode<synchronous>, transform_indices = @transform_2, window_bounds = array<i64: 2, 128>}, {transform_indices = @transform_3, window_bounds = array<i64: 8, 2>}]} {
    %c0 = arith.constant 0 : index
    %c0_0 = arith.constant 0 : index
    %0 = vector.load %arg1[%c0, %c0_0] : memref<8x128xf32, #tpu.memory_space<vmem>>, vector<8x128xf32>
    %c0_1 = arith.constant 0 : index
    %c0_2 = arith.constant 0 : index
    %1 = vector.load %arg3[%c0_1, %c0_2] : memref<2x128xf32, #tpu.memory_space<vmem>>, vector<1x128xf32>
    %2 = vector.broadcast %1 : vector<1x128xf32> to vector<8x128xf32>
    %3 = arith.mulf %0, %2 : vector<8x128xf32>
    %cst = arith.constant dense<0.000000e+00> : vector<8xf32>
    %4 = vector.multi_reduction <add>, %3, %cst [1] : vector<8x128xf32> to vector<8xf32>
    %5 = vector.shape_cast %4 : vector<8xf32> to vector<8x1xf32>
    %c0_3 = arith.constant 0 : index
    %c0_4 = arith.constant 0 : index
    %6 = vector.load %arg4[%c0_3, %c0_4] : memref<8x2xf32, #tpu.memory_space<vmem>>, vector<8x1xf32>
    tpu.vector_store %arg4[%c0_3, %c0_4], %5 {strides = array<i32>} : memref<8x2xf32, #tpu.memory_space<vmem>>, vector<8x1xf32>,
    %c0_5 = arith.constant 0 : index
    %c0_6 = arith.constant 0 : index
    %7 = vector.load %arg2[%c0_5, %c0_6] : memref<8x128xf32, #tpu.memory_space<vmem>>, vector<8x128xf32>
    %c1 = arith.constant 1 : index
    %c0_7 = arith.constant 0 : index
    %8 = vector.load %arg3[%c1, %c0_7] : memref<2x128xf32, #tpu.memory_space<vmem>>, vector<1x128xf32>
    %9 = vector.broadcast %8 : vector<1x128xf32> to vector<8x128xf32>
    %10 = arith.mulf %7, %9 : vector<8x128xf32>
    %cst_8 = arith.constant dense<0.000000e+00> : vector<8xf32>
    %11 = vector.multi_reduction <add>, %10, %cst_8 [1] : vector<8x128xf32> to vector<8xf32>
    %12 = vector.shape_cast %11 : vector<8xf32> to vector<8x1xf32>
    %c0_9 = arith.constant 0 : index
    %c1_10 = arith.constant 1 : index
    %13 = vector.load %arg4[%c0_9, %c1_10] : memref<8x2xf32, #tpu.memory_space<vmem>>, vector<8x1xf32>
    tpu.vector_store %arg4[%c0_9, %c1_10], %12 {strides = array<i32>} : memref<8x2xf32, #tpu.memory_space<vmem>>, vector<8x1xf32>,
    return
  }
  func.func @transform_0(%arg0: i32) -> (i32, i32) {
    %c0_i32 = arith.constant 0 : i32
    %c0_i32_0 = arith.constant 0 : i32
    return %arg0, %c0_i32 : i32, i32
  }
  func.func @transform_1(%arg0: i32) -> (i32, i32) {
    %c0_i32 = arith.constant 0 : i32
    %c0_i32_0 = arith.constant 0 : i32
    return %arg0, %c0_i32 : i32, i32
  }
  func.func @transform_2(%arg0: i32) -> (i32, i32) {
    %c0_i32 = arith.constant 0 : i32
    %c0_i32_0 = arith.constant 0 : i32
    %c0_i32_1 = arith.constant 0 : i32
    return %c0_i32, %c0_i32_0 : i32, i32
  }
  func.func @transform_3(%arg0: i32) -> (i32, i32) {
    %c0_i32 = arith.constant 0 : i32
    %c0_i32_0 = arith.constant 0 : i32
    return %arg0, %c0_i32 : i32, i32
  }
}

</mosaic_0001>

<llo_original>
// kernel: tpu_custom_call.1
$region0: #{tpu_custom_call.1}
  #allocation0 [shape = 'u32[]', space=smem, size = 0x4, offset = 0x4, fixed_abs, tag = 'smem constant byte address 0x4 - core index']
  #allocation1 [shape = 'u32[144,128]{1,0:T(1,128)}', space=vmem, size = 0x12000, scoped, tag = 'internal scratch']
  %s0 = inlined_call_operand.hbm [shape: f32[8,128], index: 0, kind: input, shape index: {}]
  %s1 = inlined_call_operand.hbm [shape: f32[8,128], index: 1, kind: input, shape index: {}]
  %s2 = inlined_call_operand.vmem [shape: f32[2,128], index: 2, kind: input, shape index: {}]
  %s3 = inlined_call_operand.vmem [shape: f32[8,2], index: 3, kind: output, shape index: {}]
  %s4 = sld [smem:[#allocation0]]
  $region30: #{tpu_custom_call.1} parent=0
    _
  %s6 = ssub.s32 1, %s4
  %s7 = scalar_select 0, %s6, %s4
  $region1: #{tpu_custom_call.1} parent=0
    #allocation2 [shape = 'u8[4096]{0}', space=vmem, size = 0x1000, scoped, tag = 'input window, operand 0, single buffered']
    #allocation3 [shape = 's32[1]{0}', space=sflag, size = 0x4, scoped, tag = 'scoped memory for tpu_custom_call.1']
    #allocation4 [shape = 'u8[4096]{0}', space=vmem, size = 0x1000, scoped, tag = 'input window, operand 1, single buffered']
    #allocation5 [shape = 's32[1]{0}', space=sflag, size = 0x4, scoped, tag = 'scoped memory for tpu_custom_call.1']
    %8 = vsyncpa [#allocation3], 0
    %9 = vsyncpa [#allocation5], 0
    // Predicated region
    $region2: #{tpu_custom_call.1} parent=1 // pred_check
      _
    $region3: #{tpu_custom_call.1} parent=1 // pred_check_branch
      %11 = sbr.rel (0) target = $region5
    $region4: #{tpu_custom_call.1} parent=1 // pred_region
      %s13 = ssub.s32 128, 128
      %14 = vsyncadd [#allocation3], %s13
      %s16 = sshll.u32 [#allocation2], 4
      %s17 = int_to_ptr.vmem [resolvable:$true] %s16
      %19 = dma.hbm_to_vmem [thread:$0]  %s0, 128, %s17, [#allocation3]
    $region5: #{tpu_custom_call.1} parent=1 // pred_fallthru
      _
    // Predicated region
    $region6: #{tpu_custom_call.1} parent=1 // pred_check
      _
    $region7: #{tpu_custom_call.1} parent=1 // pred_check_branch
      %21 = sbr.rel (0) target = $region9
    $region8: #{tpu_custom_call.1} parent=1 // pred_region
      %s23 = ssub.s32 128, 128
      %24 = vsyncadd [#allocation5], %s23
      %s26 = sshll.u32 [#allocation4], 4
      %s27 = int_to_ptr.vmem [resolvable:$true] %s26
      %29 = dma.hbm_to_vmem [thread:$0]  %s1, 128, %s27, [#allocation5]
    $region9: #{tpu_custom_call.1} parent=1 // pred_fallthru
      _
    // Predicated region
    $region10: #{tpu_custom_call.1} parent=1 // pred_check
      _
    $region11: #{tpu_custom_call.1} parent=1 // pred_check_branch
      %31 = sbr.rel (0) target = $region13
    $region12: #{tpu_custom_call.1} parent=1 // pred_region
      _
    $region13: #{tpu_custom_call.1} parent=1 // pred_fallthru
      _
    // Predicated region
    $region14: #{tpu_custom_call.1} parent=1 // pred_check
      _
    $region15: #{tpu_custom_call.1} parent=1 // pred_check_branch
      %33 = sbr.rel (0) target = $region17
    $region16: #{tpu_custom_call.1} parent=1 // pred_region
      %34 = dma.done [#allocation3], 128
    $region17: #{tpu_custom_call.1} parent=1 // pred_fallthru
      _
    // Predicated region
    $region18: #{tpu_custom_call.1} parent=1 // pred_check
      _
    $region19: #{tpu_custom_call.1} parent=1 // pred_check_branch
      %36 = sbr.rel (0) target = $region21
    $region20: #{tpu_custom_call.1} parent=1 // pred_region
      %37 = dma.done [#allocation5], 128
    $region21: #{tpu_custom_call.1} parent=1 // pred_fallthru
      _
    %v38 = vld [vmem:[#allocation2] sm:$0xff]
    %v39 = vld [vmem:[%s2] sm:$0x1]
    %v40 = vlaneseq
    %v41 = vshrl.u32 %v40, 7
    %v42 = vsub.s32 0, %v41
    %v43 = vrot.slane %v39, %v42
    %v44 = vmul.f32 %v38, %v43
    %45 = vadd.xlane.f32.xlu0 %v44
    %v46 = vpop.xlane.xlu0 %45
    %vm47 = vcmask 7168
    %48 = vst.msk [vmem:[%s3] sm:$0xff] %vm47, %v46
    %v49 = vld [vmem:[#allocation4] sm:$0xff]
    %v50 = vld [vmem:[%s2 + $0x1] sm:$0x1]
    %v51 = vlaneseq
    %v52 = vshrl.u32 %v51, 7
    %v53 = vsub.s32 0, %v52
    %v54 = vrot.slane %v50, %v53
    %v55 = vmul.f32 %v49, %v54
    %56 = vadd.xlane.f32.xlu0 %v55
    %v57 = vpop.xlane.xlu0 %56
    %vm58 = vcmask 15368
    %59 = vst.msk [vmem:[%s3] sm:$0xff] %vm58, %v57
    // Predicated region
    $region22: #{tpu_custom_call.1} parent=1 // pred_check
      _
    $region23: #{tpu_custom_call.1} parent=1 // pred_check_branch
      %61 = sbr.rel (0) target = $region25
    $region24: #{tpu_custom_call.1} parent=1 // pred_region
      _
    $region25: #{tpu_custom_call.1} parent=1 // pred_fallthru
      _
    // Predicated region
    $region26: #{tpu_custom_call.1} parent=1 // pred_check
      _
    $region27: #{tpu_custom_call.1} parent=1 // pred_check_branch
      %63 = sbr.rel (0) target = $region29
    $region28: #{tpu_custom_call.1} parent=1 // pred_region
      _
    $region29: #{tpu_custom_call.1} parent=1 // pred_fallthru
      _
    %64 = vsyncpa [#allocation3], 1
    %65 = vsyncpa [#allocation5], 1

</llo_original>
